<compile_context>
chip_gen: v7x
topology: tpu7x:2x2x1
jax: 0.10.0
libtpu: 0.0.40
codegen_flags: <defaults>
</compile_context>

<pallas_src>
import functools
import math

import jax
import jax.numpy as jnp
from jax.experimental import pallas as pl
from jax.experimental.pallas import tpu as pltpu


# ---------------------------------------------------------------------------
# Device heuristics
# ---------------------------------------------------------------------------

def _device_kind() -> str:
    try:
        return jax.devices()[0].device_kind.lower()
    except Exception:  # pragma: no cover - defensive
        return ""


def _default_pallas_min_bytes() -> int:
    kind = _device_kind()
    if "v7" in kind:       # 3.2 TB/s: 1 MiB of traffic is < 1 us, launch overhead wins
        return 8 << 20
    if "v6" in kind:
        return 2 << 20
    return 1 << 20


def _default_num_shards() -> int:
    # v7x has 2 TensorCores per chip; issuing DMAs from both roughly doubles
    # outstanding-descriptor capacity.  On 1-TC chips a grid only serializes
    # the DMA waves, so keep a single shard there.
    return 2 if "v7" in _device_kind() else 1


# ---------------------------------------------------------------------------
# Kernel: pure HBM->HBM DMA concat
# ---------------------------------------------------------------------------

def _issue_chunks(in_refs, out_ref, sems, chunks, axis, ndim):
    """Start all DMAs for one shard's chunk list, then wait on all of them.

    Chunk entries are (global_chunk_id, input_idx, src_start, size, dst_start)
    with static Python ints, so every copy is a single strided rectangular DMA
    descriptor and all copies (disjoint destinations) run concurrently.
    """
    copies = []
    for cid, i, src_start, size, dst_start in chunks:
        src_idx = [slice(None)] * ndim
        src_idx[axis] = pl.ds(src_start, size)
        dst_idx = [slice(None)] * ndim
        dst_idx[axis] = pl.ds(dst_start, size)
        cp = pltpu.make_async_copy(
            in_refs[i].at[tuple(src_idx)],
            out_ref.at[tuple(dst_idx)],
            sems.at[cid],
        )
        cp.start()
        copies.append(cp)
    for cp in copies:
        cp.wait()


def _dma_concat_kernel(*refs, plan, num_inputs, axis, ndim, sharded):
    """refs = (*in_hbm_refs, out_hbm_ref, dma_sems)."""
    in_refs = refs[:num_inputs]
    out_ref = refs[num_inputs]
    sems = refs[num_inputs + 1]

    if not sharded:
        _issue_chunks(in_refs, out_ref, sems, plan[0], axis, ndim)
        return

    pid = pl.program_id(0)
    for shard_id, chunks in enumerate(plan):
        if not chunks:
            continue

        @pl.when(pid == shard_id)
        def _run(chunks=chunks):
            _issue_chunks(in_refs, out_ref, sems, chunks, axis, ndim)


# ---------------------------------------------------------------------------
# Copy planning (all static Python ints)
# ---------------------------------------------------------------------------

def _plan_copies(xs, axis, num_shards, target_chunk_bytes, max_total_chunks):
    """Split every input's concat-axis range into per-shard, ~target-sized chunks.

    Returns (plan, num_chunks) where plan[s] is the chunk list for shard s.
    """
    itemsize = xs[0].dtype.itemsize
    shape = xs[0].shape
    pre = math.prod(shape[:axis])
    inner = math.prod(shape[axis + 1:])
    per_unit_bytes = max(1, pre * inner * itemsize)  # bytes per 1-wide axis slice

    total_bytes = sum(int(x.size) * itemsize for x in xs)
    eff_target = max(int(target_chunk_bytes),
                     -(-total_bytes // max(1, max_total_chunks)))

    plan = [[] for _ in range(num_shards)]
    cid = 0
    dst_off = 0
    for i, x in enumerate(xs):
        c = x.shape[axis]
        for s in range(num_shards):
            lo = (c * s) // num_shards
            hi = (c * (s + 1)) // num_shards
            if hi <= lo:
                continue
            length = hi - lo
            want = -(-(length * per_unit_bytes) // eff_target)
            n_chunks = max(1, min(length, want))
            for j in range(n_chunks):
                a = lo + (length * j) // n_chunks
                b = lo + (length * (j + 1)) // n_chunks
                if b > a:
                    plan[s].append((cid, i, a, b - a, dst_off + a))
                    cid += 1
        dst_off += c
    return plan, cid


def _pallas_concat(xs, axis, *, num_shards, target_chunk_bytes=8 << 20,
                   max_total_chunks=64):
    num_inputs = len(xs)
    dtype = xs[0].dtype
    ndim = xs[0].ndim

    out_shape = list(xs[0].shape)
    out_shape[axis] = sum(x.shape[axis] for x in xs)
    out_shape = tuple(out_shape)

    # Clamp shard count so every shard gets at least one unit of the smallest
    # input (keeps every per-shard slice non-degenerate).
    min_c = min(x.shape[axis] for x in xs)
    num_shards = max(1, min(int(num_shards), min_c))
    sharded = num_shards > 1

    plan, num_chunks = _plan_copies(xs, axis, num_shards, target_chunk_bytes,
                                    max_total_chunks)

    kernel = functools.partial(
        _dma_concat_kernel,
        plan=plan, num_inputs=num_inputs, axis=axis, ndim=ndim,
        sharded=sharded,
    )

    total_bytes = sum(int(x.size) * x.dtype.itemsize for x in xs)

    call_kwargs = {}
    if sharded:
        # One grid step per shard; "parallel" lets v7x spread the shards across
        # both TensorCores (issue/queue parallelism, shared HBM bandwidth).
        call_kwargs["grid"] = (num_shards,)
        call_kwargs["compiler_params"] = pltpu.CompilerParams(
            dimension_semantics=("parallel",))

    return pl.pallas_call(
        kernel,
        in_specs=[pl.BlockSpec(memory_space=pl.ANY) for _ in xs],
        out_specs=pl.BlockSpec(memory_space=pl.ANY),
        out_shape=jax.ShapeDtypeStruct(out_shape, dtype),
        scratch_shapes=[pltpu.SemaphoreType.DMA((num_chunks,))],
        # Pure HBM traffic: every byte is read once and written once.
        cost_estimate=pl.CostEstimate(
            flops=0, transcendentals=0, bytes_accessed=2 * total_bytes),
        **call_kwargs,
    )(*xs)


# ---------------------------------------------------------------------------
# Public wrapper (== torch.cat(xs, dim=dimension))
# ---------------------------------------------------------------------------

def concat(xs, dimension: int = 1, *, use_pallas=None, pallas_min_bytes=None,
           num_shards=None, min_run_bytes=512):
    """Pallas equivalent of torch.cat(xs, dim=dimension)."""
    xs = list(xs)
    if not xs:
        raise ValueError("concat() requires at least one input tensor")

    ndim = xs[0].ndim
    axis = dimension % ndim

    # Validate non-concat dims up front (clear error instead of a Mosaic one).
    ref_shape = xs[0].shape
    for k, x in enumerate(xs):
        if x.ndim != ndim:
            raise ValueError(f"input {k} has rank {x.ndim}, expected {ndim}")
        for d in range(ndim):
            if d != axis and x.shape[d] != ref_shape[d]:
                raise ValueError(
                    f"input {k} shape {x.shape} mismatches input 0 shape "
                    f"{ref_shape} on non-concat axis {d}")

    if len(xs) == 1:
        return xs[0]

    # Mixed dtypes: fall back so XLA fuses the convert into the copy instead of
    # paying an extra astype read+write pass before a DMA-only kernel.
    if len({x.dtype for x in xs}) > 1:
        return jnp.concatenate(xs, axis=axis)

    # Drop inputs that are empty along the concat axis; zero-byte DMAs are at
    # best wasted descriptors and semaphore waits.
    nonempty = [x for x in xs if x.shape[axis] > 0]
    if not nonempty:
        return jnp.concatenate(xs, axis=axis)
    if len(nonempty) == 1:
        return nonempty[0]

    itemsize = nonempty[0].dtype.itemsize
    inner = math.prod(ref_shape[axis + 1:])
    total_bytes = sum(int(x.size) * itemsize for x in nonempty)
    # Smallest contiguous source/destination run any single copy produces
    # (a full-axis slab of one input, with all trailing dims).
    min_run = min(x.shape[axis] for x in nonempty) * inner * itemsize

    if pallas_min_bytes is None:
        pallas_min_bytes = _default_pallas_min_bytes()
    if num_shards is None:
        num_shards = _default_num_shards()

    if use_pallas is None:
        # Keep the fallback aggressive: XLA already lowers concats to
        # near-roofline DMAs and can fuse/elide them; only take the Pallas path
        # for large concats with long contiguous runs.
        use_pallas = (total_bytes >= pallas_min_bytes
                      and min_run >= min_run_bytes)
    if not use_pallas:
        return jnp.concatenate(nonempty, axis=axis)

    return _pallas_concat(nonempty, axis, num_shards=num_shards)


if __name__ == "__main__":
    key = jax.random.PRNGKey(0)
    k1, k2, k3 = jax.random.split(key, 3)

    # Typical Concat usage in YOLOv5: concatenate feature maps along channels.
    # NCHW inputs with matching N, H, W and differing C.
    x1 = jax.random.normal(k1, (2, 4, 16, 16), dtype=jnp.float32)
    x2 = jax.random.normal(k2, (2, 8, 16, 16), dtype=jnp.float32)
    x3 = jax.random.normal(k3, (2, 4, 16, 16), dtype=jnp.float32)

    ref = jnp.concatenate([x1, x2, x3], axis=1)

    # 1) Force the single-shard Pallas DMA kernel (the path large v5e/v6e
    #    concats take).
    out = jax.block_until_ready(
        concat([x1, x2, x3], dimension=1, use_pallas=True, num_shards=1))
    assert out.shape == (2, 16, 16, 16), out.shape
    assert out.dtype == ref.dtype, (out.dtype, ref.dtype)
    assert bool(jnp.array_equal(out, ref)), "Pallas concat mismatch (1 shard)"

    # 2) Force the sharded (grid + "parallel") path v7x uses to issue DMAs from
    #    both TensorCores; on 1-TC chips the shards run back-to-back and the
    #    result must be identical.
    out_sh = jax.block_until_ready(
        concat([x1, x2, x3], dimension=1, use_pallas=True, num_shards=2))
    assert bool(jnp.array_equal(out_sh, ref)), "Pallas concat mismatch (2 shards)"

    # 3) Default auto path: tiny total bytes -> jnp.concatenate fallback.
    out_auto = jax.block_until_ready(concat([x1, x2, x3], dimension=1))
    assert bool(jnp.array_equal(out_auto, ref))

    # 4) Last-axis concat (short contiguous runs): run-length gate falls back.
    y1 = jax.random.normal(k1, (2, 16, 16, 4), dtype=jnp.float32)
    y2 = jax.random.normal(k2, (2, 16, 16, 8), dtype=jnp.float32)
    ref_last = jnp.concatenate([y1, y2], axis=-1)
    out_last = jax.block_until_ready(concat([y1, y2], dimension=-1))
    assert bool(jnp.array_equal(out_last, ref_last))

    print("KERNEL_OK")
</pallas_src>

<mosaic_0001>
module attributes {stable_mosaic.version = 11 : i64} {
  func.func @_dma_concat_kernel(%arg0: memref<2x4x16x16xf32, #tpu.memory_space<any>>, %arg1: memref<2x8x16x16xf32, #tpu.memory_space<any>>, %arg2: memref<2x4x16x16xf32, #tpu.memory_space<any>>, %arg3: memref<2x16x16x16xf32, #tpu.memory_space<any>>, %arg4: memref<3x!tpu.dma_semaphore, #tpu.memory_space<semaphore_mem>>) attributes {dimension_semantics = [], scalar_prefetch = 0 : i64, scratch_operands = 1 : i64, tpu.core_type = #tpu.core_type<tc>} {
    %c0_i32 = arith.constant 0 : i32
    %c0_i32_0 = arith.constant 0 : i32
    %c0_i32_1 = arith.constant 0 : i32
    %c0_i32_2 = arith.constant 0 : i32
    %c0_i32_3 = arith.constant 0 : i32
    %0 = tpu.memref_slice %arg0[%c0_i32_0, %c0_i32_1, %c0_i32_2, %c0_i32_3] : memref<2x4x16x16xf32, #tpu.memory_space<any>> -> memref<2x4x16x16xf32, #tpu.memory_space<any>>
    %c0_i32_4 = arith.constant 0 : i32
    %c0_i32_5 = arith.constant 0 : i32
    %c0_i32_6 = arith.constant 0 : i32
    %c0_i32_7 = arith.constant 0 : i32
    %1 = tpu.memref_slice %arg3[%c0_i32_4, %c0_i32_5, %c0_i32_6, %c0_i32_7] : memref<2x16x16x16xf32, #tpu.memory_space<any>> -> memref<2x4x16x16xf32, #tpu.memory_space<any>>
    %2 = tpu.memref_slice %arg4[%c0_i32] : memref<3x!tpu.dma_semaphore, #tpu.memory_space<semaphore_mem>> -> memref<1x!tpu.dma_semaphore, #tpu.memory_space<semaphore_mem>>
    %3 = tpu.memref_squeeze %2 : memref<1x!tpu.dma_semaphore, #tpu.memory_space<semaphore_mem>> -> memref<!tpu.dma_semaphore, #tpu.memory_space<semaphore_mem>>
    tpu.enqueue_dma source(%0 : memref<2x4x16x16xf32, #tpu.memory_space<any>>) target(%1 : memref<2x4x16x16xf32, #tpu.memory_space<any>>) target_semaphore(%3 : memref<!tpu.dma_semaphore, #tpu.memory_space<semaphore_mem>>)
    %c1_i32 = arith.constant 1 : i32
    %c0_i32_8 = arith.constant 0 : i32
    %c0_i32_9 = arith.constant 0 : i32
    %c0_i32_10 = arith.constant 0 : i32
    %c0_i32_11 = arith.constant 0 : i32
    %4 = tpu.memref_slice %arg1[%c0_i32_8, %c0_i32_9, %c0_i32_10, %c0_i32_11] : memref<2x8x16x16xf32, #tpu.memory_space<any>> -> memref<2x8x16x16xf32, #tpu.memory_space<any>>
    %c0_i32_12 = arith.constant 0 : i32
    %c4_i32 = arith.constant 4 : i32
    %c0_i32_13 = arith.constant 0 : i32
    %c0_i32_14 = arith.constant 0 : i32
    %5 = tpu.memref_slice %arg3[%c0_i32_12, %c4_i32, %c0_i32_13, %c0_i32_14] : memref<2x16x16x16xf32, #tpu.memory_space<any>> -> memref<2x8x16x16xf32, #tpu.memory_space<any>>
    %6 = tpu.memref_slice %arg4[%c1_i32] : memref<3x!tpu.dma_semaphore, #tpu.memory_space<semaphore_mem>> -> memref<1x!tpu.dma_semaphore, #tpu.memory_space<semaphore_mem>>
    %7 = tpu.memref_squeeze %6 : memref<1x!tpu.dma_semaphore, #tpu.memory_space<semaphore_mem>> -> memref<!tpu.dma_semaphore, #tpu.memory_space<semaphore_mem>>
    tpu.enqueue_dma source(%4 : memref<2x8x16x16xf32, #tpu.memory_space<any>>) target(%5 : memref<2x8x16x16xf32, #tpu.memory_space<any>>) target_semaphore(%7 : memref<!tpu.dma_semaphore, #tpu.memory_space<semaphore_mem>>)
    %c2_i32 = arith.constant 2 : i32
    %c0_i32_15 = arith.constant 0 : i32
    %c0_i32_16 = arith.constant 0 : i32
    %c0_i32_17 = arith.constant 0 : i32
    %c0_i32_18 = arith.constant 0 : i32
    %8 = tpu.memref_slice %arg2[%c0_i32_15, %c0_i32_16, %c0_i32_17, %c0_i32_18] : memref<2x4x16x16xf32, #tpu.memory_space<any>> -> memref<2x4x16x16xf32, #tpu.memory_space<any>>
    %c0_i32_19 = arith.constant 0 : i32
    %c12_i32 = arith.constant 12 : i32
    %c0_i32_20 = arith.constant 0 : i32
    %c0_i32_21 = arith.constant 0 : i32
    %9 = tpu.memref_slice %arg3[%c0_i32_19, %c12_i32, %c0_i32_20, %c0_i32_21] : memref<2x16x16x16xf32, #tpu.memory_space<any>> -> memref<2x4x16x16xf32, #tpu.memory_space<any>>
    %10 = tpu.memref_slice %arg4[%c2_i32] : memref<3x!tpu.dma_semaphore, #tpu.memory_space<semaphore_mem>> -> memref<1x!tpu.dma_semaphore, #tpu.memory_space<semaphore_mem>>
    %11 = tpu.memref_squeeze %10 : memref<1x!tpu.dma_semaphore, #tpu.memory_space<semaphore_mem>> -> memref<!tpu.dma_semaphore, #tpu.memory_space<semaphore_mem>>
    tpu.enqueue_dma source(%8 : memref<2x4x16x16xf32, #tpu.memory_space<any>>) target(%9 : memref<2x4x16x16xf32, #tpu.memory_space<any>>) target_semaphore(%11 : memref<!tpu.dma_semaphore, #tpu.memory_space<semaphore_mem>>)
    %c0_i32_22 = arith.constant 0 : i32
    %c0_i32_23 = arith.constant 0 : i32
    %c0_i32_24 = arith.constant 0 : i32
    %c0_i32_25 = arith.constant 0 : i32
    %c0_i32_26 = arith.constant 0 : i32
    %12 = tpu.memref_slice %arg0[%c0_i32_23, %c0_i32_24, %c0_i32_25, %c0_i32_26] : memref<2x4x16x16xf32, #tpu.memory_space<any>> -> memref<2x4x16x16xf32, #tpu.memory_space<any>>
    %c0_i32_27 = arith.constant 0 : i32
    %c0_i32_28 = arith.constant 0 : i32
    %c0_i32_29 = arith.constant 0 : i32
    %c0_i32_30 = arith.constant 0 : i32
    %13 = tpu.memref_slice %arg3[%c0_i32_27, %c0_i32_28, %c0_i32_29, %c0_i32_30] : memref<2x16x16x16xf32, #tpu.memory_space<any>> -> memref<2x4x16x16xf32, #tpu.memory_space<any>>
    %14 = tpu.memref_slice %arg4[%c0_i32_22] : memref<3x!tpu.dma_semaphore, #tpu.memory_space<semaphore_mem>> -> memref<1x!tpu.dma_semaphore, #tpu.memory_space<semaphore_mem>>
    %15 = tpu.memref_squeeze %14 : memref<1x!tpu.dma_semaphore, #tpu.memory_space<semaphore_mem>> -> memref<!tpu.dma_semaphore, #tpu.memory_space<semaphore_mem>>
    tpu.wait_dma2 semaphore(%15 : memref<!tpu.dma_semaphore, #tpu.memory_space<semaphore_mem>>) src(%12 : memref<2x4x16x16xf32, #tpu.memory_space<any>>) dst(%13 : memref<2x4x16x16xf32, #tpu.memory_space<any>>)
    %c1_i32_31 = arith.constant 1 : i32
    %c0_i32_32 = arith.constant 0 : i32
    %c0_i32_33 = arith.constant 0 : i32
    %c0_i32_34 = arith.constant 0 : i32
    %c0_i32_35 = arith.constant 0 : i32
    %16 = tpu.memref_slice %arg1[%c0_i32_32, %c0_i32_33, %c0_i32_34, %c0_i32_35] : memref<2x8x16x16xf32, #tpu.memory_space<any>> -> memref<2x8x16x16xf32, #tpu.memory_space<any>>
    %c0_i32_36 = arith.constant 0 : i32
    %c4_i32_37 = arith.constant 4 : i32
    %c0_i32_38 = arith.constant 0 : i32
    %c0_i32_39 = arith.constant 0 : i32
    %17 = tpu.memref_slice %arg3[%c0_i32_36, %c4_i32_37, %c0_i32_38, %c0_i32_39] : memref<2x16x16x16xf32, #tpu.memory_space<any>> -> memref<2x8x16x16xf32, #tpu.memory_space<any>>
    %18 = tpu.memref_slice %arg4[%c1_i32_31] : memref<3x!tpu.dma_semaphore, #tpu.memory_space<semaphore_mem>> -> memref<1x!tpu.dma_semaphore, #tpu.memory_space<semaphore_mem>>
    %19 = tpu.memref_squeeze %18 : memref<1x!tpu.dma_semaphore, #tpu.memory_space<semaphore_mem>> -> memref<!tpu.dma_semaphore, #tpu.memory_space<semaphore_mem>>
    tpu.wait_dma2 semaphore(%19 : memref<!tpu.dma_semaphore, #tpu.memory_space<semaphore_mem>>) src(%16 : memref<2x8x16x16xf32, #tpu.memory_space<any>>) dst(%17 : memref<2x8x16x16xf32, #tpu.memory_space<any>>)
    %c2_i32_40 = arith.constant 2 : i32
    %c0_i32_41 = arith.constant 0 : i32
    %c0_i32_42 = arith.constant 0 : i32
    %c0_i32_43 = arith.constant 0 : i32
    %c0_i32_44 = arith.constant 0 : i32
    %20 = tpu.memref_slice %arg2[%c0_i32_41, %c0_i32_42, %c0_i32_43, %c0_i32_44] : memref<2x4x16x16xf32, #tpu.memory_space<any>> -> memref<2x4x16x16xf32, #tpu.memory_space<any>>
    %c0_i32_45 = arith.constant 0 : i32
    %c12_i32_46 = arith.constant 12 : i32
    %c0_i32_47 = arith.constant 0 : i32
    %c0_i32_48 = arith.constant 0 : i32
    %21 = tpu.memref_slice %arg3[%c0_i32_45, %c12_i32_46, %c0_i32_47, %c0_i32_48] : memref<2x16x16x16xf32, #tpu.memory_space<any>> -> memref<2x4x16x16xf32, #tpu.memory_space<any>>
    %22 = tpu.memref_slice %arg4[%c2_i32_40] : memref<3x!tpu.dma_semaphore, #tpu.memory_space<semaphore_mem>> -> memref<1x!tpu.dma_semaphore, #tpu.memory_space<semaphore_mem>>
    %23 = tpu.memref_squeeze %22 : memref<1x!tpu.dma_semaphore, #tpu.memory_space<semaphore_mem>> -> memref<!tpu.dma_semaphore, #tpu.memory_space<semaphore_mem>>
    tpu.wait_dma2 semaphore(%23 : memref<!tpu.dma_semaphore, #tpu.memory_space<semaphore_mem>>) src(%20 : memref<2x4x16x16xf32, #tpu.memory_space<any>>) dst(%21 : memref<2x4x16x16xf32, #tpu.memory_space<any>>)
    return
  }
}

</mosaic_0001>

<llo_original>
// kernel: tpu_custom_call.1
$region0: #{tpu_custom_call.1}
  #allocation0 [shape = 'u32[]', space=smem, size = 0x4, offset = 0x4, fixed_abs, tag = 'smem constant byte address 0x4 - core index']
  #allocation1 [shape = 'u32[144,128]{1,0:T(1,128)}', space=vmem, size = 0x12000, scoped, tag = 'internal scratch']
  #allocation2 [shape = 's32[3]{0}', space=sflag, size = 0xc, scoped, tag = 'scratch operand']
  #allocation3 [shape = 's32[]', space=sflag, size = 0x4, offset = 0, fixed_abs, tag = 'sflag constant byte address 0x0 - dummy sync flag']
  #allocation5 [shape = 's32[]', space=sflag, size = 0x4, offset = 0, fixed_abs, tag = 'sflag constant byte address 0x0 - dummy sync flag']
  #allocation7 [shape = 's32[]', space=sflag, size = 0x4, offset = 0, fixed_abs, tag = 'sflag constant byte address 0x0 - dummy sync flag']
  %s0 = inlined_call_operand.hbm [shape: f32[2,4,16,16], index: 0, kind: input, shape index: {}]
  %s1 = inlined_call_operand.hbm [shape: f32[2,8,16,16], index: 1, kind: input, shape index: {}]
  %s2 = inlined_call_operand.hbm [shape: f32[2,4,16,16], index: 2, kind: input, shape index: {}]
  %s3 = inlined_call_operand.hbm [shape: f32[2,16,16,16], index: 3, kind: output, shape index: {}]
  %s4 = sld [smem:[#allocation0]]
  $region2: #{tpu_custom_call.1} parent=0
    _
  %s6 = ssub.s32 1, %s4
  %s7 = scalar_select 0, %s6, %s4
  $region1: #{tpu_custom_call.1} parent=0
    #allocation4 [shape = 'u32[3]{0}', space=smem, size = 0xc, scoped, tag = 'DMA stride descriptor']
    #allocation6 [shape = 'u32[3]{0}', space=smem, size = 0xc, scoped, tag = 'DMA stride descriptor']
    #allocation8 [shape = 'u32[3]{0}', space=smem, size = 0xc, scoped, tag = 'DMA stride descriptor']
    %s9 = sshll.u32 1, 14
    %s10 = sxor.u32 4294967295, %s9
    %s13 = sshll.u32 3, 24
    %s14 = sxor.u32 4294967295, %s13
    %s15 = sand.u32 0, %s14
    %s17 = sor.u32 %s15, 0
    %20 = sst [smem:[#allocation4]] 1024
    %s21 = scalar_lea.smem [#allocation4], 1
    %22 = sst [smem:[%s21]] 4096
    %s23 = scalar_lea.smem [#allocation4], 2
    %24 = sst [smem:[%s23]] 64
    %26 = dma.general %s0, 2048, %s3, [#allocation2], [#allocation3], [#allocation4], %s17, 0
    %s27 = scalar_lea.hbm %s3, 1024
    %s28 = scalar_lea.sflag [#allocation2], 1
    %s30 = sshll.u32 1, 14
    %s31 = sxor.u32 4294967295, %s30
    %s34 = sshll.u32 3, 24
    %s35 = sxor.u32 4294967295, %s34
    %s36 = sand.u32 0, %s35
    %s38 = sor.u32 %s36, 0
    %41 = sst [smem:[#allocation6]] 2048
    %s42 = scalar_lea.smem [#allocation6], 1
    %43 = sst [smem:[%s42]] 4096
    %s44 = scalar_lea.smem [#allocation6], 2
    %45 = sst [smem:[%s44]] 128
    %47 = dma.general %s1, 4096, %s27, %s28, [#allocation5], [#allocation6], %s38, 0
    %s48 = scalar_lea.hbm %s3, 3072
    %s49 = scalar_lea.sflag [#allocation2], 2
    %s51 = sshll.u32 1, 14
    %s52 = sxor.u32 4294967295, %s51
    %s55 = sshll.u32 3, 24
    %s56 = sxor.u32 4294967295, %s55
    %s57 = sand.u32 0, %s56
    %s59 = sor.u32 %s57, 0
    %62 = sst [smem:[#allocation8]] 1024
    %s63 = scalar_lea.smem [#allocation8], 1
    %64 = sst [smem:[%s63]] 4096
    %s65 = scalar_lea.smem [#allocation8], 2
    %66 = sst [smem:[%s65]] 64
    %68 = dma.general %s2, 2048, %s48, %s49, [#allocation7], [#allocation8], %s59, 0
    %s69 = smul.u32 2, 4
    %s70 = smul.u32 %s69, 16
    %s71 = smul.u32 %s70, 1
    %s72 = sshll.u32 %s71, 4
    %73 = dma.done [#allocation2], %s72
    %s74 = smul.u32 2, 8
    %s75 = smul.u32 %s74, 16
    %s76 = smul.u32 %s75, 1
    %s77 = sshll.u32 %s76, 4
    %78 = dma.done %s28, %s77
    %s79 = sshll.u32 %s71, 4
    %80 = dma.done %s49, %s79
  %81 = vsyncmov [#allocation2]
  %s82 = vpop.sfrf %81
  %p83 = scmp.eq.s32.totalorder %s82, 0
  %p84 = pneg %p83
  %86 = shalt.err (%p84)
  %s87 = scalar_lea.sflag [#allocation2], 1
  %88 = vsyncmov %s87
  %s89 = vpop.sfrf %88
  %p90 = scmp.eq.s32.totalorder %s89, 0
  %p91 = pneg %p90
  %93 = shalt.err (%p91)
  %s94 = scalar_lea.sflag [#allocation2], 2
  %95 = vsyncmov %s94
  %s96 = vpop.sfrf %95
  %p97 = scmp.eq.s32.totalorder %s96, 0
  %p98 = pneg %p97
  %100 = shalt.err (%p98)

</llo_original>
